<compile_context>
chip_gen: v7x
topology: tpu7x:2x2x1
jax: 0.10.0
libtpu: 0.0.40
codegen_flags: <defaults>
</compile_context>

<pallas_src>
import functools

import jax
import jax.numpy as jnp
from jax import lax
from jax.experimental import pallas as pl
from jax.experimental.pallas import tpu as pltpu


_LANE = 128          # TPU lane width: class axis is padded to this
_NEG_INF = -1e30     # bias for padded (fake) classes -> exp() == 0 exactly


def _round_up(x, m):
    return ((x + m - 1) // m) * m


def _softmax_classifier_kernel(x_ref, w_ref, b_ref, o_ref, *, n_rows, tile_m):
    # x_ref: (TM, D) f32   w_ref: (D, Kp) bf16   b_ref: (1, Kp) f32
    # o_ref: (TM, Kp) f32
    x_bf = x_ref[...].astype(jnp.bfloat16)           # in-kernel cast (free VPU slack)
    scores = jnp.dot(x_bf, w_ref[...],
                     preferred_element_type=jnp.float32)
    scores = scores + b_ref[...]                     # broadcast bias over rows

    # Defensive: the last batch tile may extend past N; those rows are masked
    # on writeback, but keep their arithmetic finite anyway.
    row = (pl.program_id(0) * tile_m
           + lax.broadcasted_iota(jnp.int32, (tile_m, 1), 0))
    scores = jnp.where(row < n_rows, scores, 0.0)

    m = jnp.max(scores, axis=-1, keepdims=True)      # stable softmax (dim=1)
    e = jnp.exp(scores - m)                          # padded cols -> exp == 0
    denom = jnp.sum(e, axis=-1, keepdims=True)
    o_ref[...] = (e / denom).astype(o_ref.dtype)     # exact normalization


def softmax_classifier(images, weight, bias, *, tile_m=2048):
    """Forward pass of the PyTorch `Softmax` module.

    images: (N, C, H, W) float; weight: (K, D) float (PyTorch Linear layout);
    bias: (K,) float.  Returns (N, K) f32 class probabilities.
    """
    N, C, H, W = images.shape
    D = C * H * W
    K = weight.shape[0]

    # --- layout glue (plain JAX, outside the kernel) ------------------------
    x = images.reshape(N, D)                         # same as torch .view(N, -1)

    # Pad the class axis to a lane-dense multiple of 128; build W directly in
    # bf16 (padded columns are 0, padded bias entries are -1e30).
    Kp = _round_up(max(K, 1), _LANE)
    w_bf = jnp.zeros((D, Kp), jnp.bfloat16).at[:, :K].set(
        weight.T.astype(jnp.bfloat16))
    b_p = jnp.full((1, Kp), _NEG_INF, jnp.float32).at[0, :K].set(
        bias.astype(jnp.float32))

    # Batch tile: large tiles amortize per-step overhead; guarantee >= 2 tiles
    # when possible so a v7x megacore can shard the "parallel" batch axis.
    if N >= 2 * tile_m:
        tm = tile_m
    else:
        tm = min(tile_m, max(8, _round_up(-(-N // 2), 8)))
    grid_m = pl.cdiv(N, tm)

    kernel = functools.partial(_softmax_classifier_kernel, n_rows=N, tile_m=tm)

    out = pl.pallas_call(
        kernel,
        out_shape=jax.ShapeDtypeStruct((N, Kp), jnp.float32),
        grid_spec=pltpu.PrefetchScalarGridSpec(
            num_scalar_prefetch=0,
            grid=(grid_m,),
            in_specs=[
                pl.BlockSpec((tm, D), lambda i: (i, 0)),    # X: streamed f32 tiles
                pl.BlockSpec((D, Kp), lambda i: (0, 0)),    # W: VMEM-resident bf16
                pl.BlockSpec((1, Kp), lambda i: (0, 0)),    # bias: resident
            ],
            out_specs=pl.BlockSpec((tm, Kp), lambda i: (i, 0)),
        ),
        compiler_params=pltpu.CompilerParams(
            # batch tiles are independent -> shard across TCs on v7x
            dimension_semantics=("parallel",),
            # 2*(tm*D*4) + 2*(tm*Kp*4) + W/bias ~ 19 MiB at tm=2048, D=1024:
            # above v5e's 16 MiB default scoped VMEM, so raise the limit.
            vmem_limit_bytes=32 << 20,
        ),
    )(x, w_bf, b_p)

    return out[:, :K]


if __name__ == "__main__":
    # Module config: im_size = (C, H, W) = (4, 16, 16), n_classes = 10
    N, C, H, W = 2, 4, 16, 16
    n_classes = 10
    D = C * H * W

    key = jax.random.PRNGKey(0)
    k_x, k_w, k_b = jax.random.split(key, 3)

    images = jax.random.normal(k_x, (N, C, H, W), dtype=jnp.float32)

    # Deterministic parameter init (PyTorch Linear uses U(-1/sqrt(D), 1/sqrt(D)))
    bound = 1.0 / (D ** 0.5)
    weight = jax.random.uniform(k_w, (n_classes, D), jnp.float32, -bound, bound)
    bias = jax.random.uniform(k_b, (n_classes,), jnp.float32, -bound, bound)

    out = softmax_classifier(images, weight, bias)
    out = jax.block_until_ready(out)

    # Reference consistent with the kernel's bf16 matmul operands (f32 accum).
    x32 = images.reshape(N, -1)
    ref_scores = (x32.astype(jnp.bfloat16).astype(jnp.float32)
                  @ weight.T.astype(jnp.bfloat16).astype(jnp.float32)) + bias
    ref = jax.nn.softmax(ref_scores, axis=1)

    assert out.shape == (N, n_classes)
    assert bool(jnp.all(jnp.isfinite(out)))
    assert jnp.allclose(out, ref, atol=1e-3, rtol=1e-3), \
        f"max abs err = {float(jnp.max(jnp.abs(out - ref)))}"
    assert jnp.allclose(jnp.sum(out, axis=1), 1.0, atol=1e-3), \
        f"row sums = {jnp.sum(out, axis=1)}"

    print("KERNEL_OK")
</pallas_src>

<mosaic_0001>
module attributes {stable_mosaic.version = 11 : i64} {
  func.func @_softmax_classifier_kernel(%arg0: i32, %arg1: memref<8x1024xf32, #tpu.memory_space<vmem>>, %arg2: memref<1024x128xbf16, #tpu.memory_space<vmem>>, %arg3: memref<1x128xf32, #tpu.memory_space<vmem>>, %arg4: memref<8x128xf32, #tpu.memory_space<vmem>>) attributes {dimension_semantics = [#tpu.dimension_semantics<parallel>], iteration_bounds = array<i64: 1>, scalar_prefetch = 0 : i64, scratch_operands = 0 : i64, tpu.core_type = #tpu.core_type<tc>, window_params = [{transform_indices = @transform_0, window_bounds = array<i64: 8, 1024>}, {pipeline_mode = #tpu.pipeline_mode<synchronous>, transform_indices = @transform_1, window_bounds = array<i64: 1024, 128>}, {pipeline_mode = #tpu.pipeline_mode<synchronous>, transform_indices = @transform_2, window_bounds = array<i64: 1, 128>}, {transform_indices = @transform_3, window_bounds = array<i64: 8, 128>}]} {
    %c0 = arith.constant 0 : index
    %c0_0 = arith.constant 0 : index
    %0 = vector.load %arg1[%c0, %c0_0] : memref<8x1024xf32, #tpu.memory_space<vmem>>, vector<8x1024xf32>
    %1 = arith.truncf %0 : vector<8x1024xf32> to vector<8x1024xbf16>
    %c0_1 = arith.constant 0 : index
    %c0_2 = arith.constant 0 : index
    %2 = vector.load %arg2[%c0_1, %c0_2] : memref<1024x128xbf16, #tpu.memory_space<vmem>>, vector<1024x128xbf16>
    %cst = arith.constant dense<0.000000e+00> : vector<8x128xf32>
    %3 = tpu.matmul %1, %2, %cst {dimension_numbers = #tpu.dot_dimension_numbers<[1], [0], [0], [1], [0, 0, 1, 1], [], []>} : vector<8x1024xbf16>, vector<1024x128xbf16>, vector<8x128xf32> -> vector<8x128xf32>
    %c0_3 = arith.constant 0 : index
    %c0_4 = arith.constant 0 : index
    %4 = vector.load %arg3[%c0_3, %c0_4] : memref<1x128xf32, #tpu.memory_space<vmem>>, vector<1x128xf32>
    %5 = vector.broadcast %4 : vector<1x128xf32> to vector<8x128xf32>
    %6 = arith.addf %3, %5 : vector<8x128xf32>
    %c8_i32 = arith.constant 8 : i32
    %7 = arith.muli %arg0, %c8_i32 : i32
    %8 = tpu.iota {dimensions = array<i32: 0>} : vector<8x1xi32>
    %9 = vector.broadcast %7 : i32 to vector<8x1xi32>
    %10 = arith.addi %9, %8 : vector<8x1xi32>
    %c2_i32 = arith.constant 2 : i32
    %11 = vector.broadcast %c2_i32 : i32 to vector<8x1xi32>
    %12 = arith.cmpi slt, %10, %11 : vector<8x1xi32>
    %cst_5 = arith.constant 0.000000e+00 : f32
    %13 = vector.shape_cast %12 : vector<8x1xi1> to vector<8x1xi1>
    %14 = vector.broadcast %13 : vector<8x1xi1> to vector<8x128xi1>
    %15 = vector.broadcast %cst_5 : f32 to vector<8x128xf32>
    %16 = arith.select %14, %6, %15 : vector<8x128xi1>, vector<8x128xf32>
    %cst_6 = arith.constant dense<0xFF800000> : vector<8xf32>
    %17 = vector.multi_reduction <maximumf>, %16, %cst_6 [1] : vector<8x128xf32> to vector<8xf32>
    %18 = vector.shape_cast %17 : vector<8xf32> to vector<8x1xf32>
    %19 = vector.broadcast %18 : vector<8x1xf32> to vector<8x128xf32>
    %20 = arith.subf %16, %19 : vector<8x128xf32>
    %21 = math.exp %20 : vector<8x128xf32>
    %cst_7 = arith.constant dense<0.000000e+00> : vector<8xf32>
    %22 = vector.multi_reduction <add>, %21, %cst_7 [1] : vector<8x128xf32> to vector<8xf32>
    %23 = vector.shape_cast %22 : vector<8xf32> to vector<8x1xf32>
    %24 = vector.broadcast %23 : vector<8x1xf32> to vector<8x128xf32>
    %25 = arith.divf %21, %24 : vector<8x128xf32>
    %c0_8 = arith.constant 0 : index
    %c0_9 = arith.constant 0 : index
    %26 = vector.load %arg4[%c0_8, %c0_9] : memref<8x128xf32, #tpu.memory_space<vmem>>, vector<8x128xf32>
    tpu.vector_store %arg4[%c0_8, %c0_9], %25 {strides = array<i32>} : memref<8x128xf32, #tpu.memory_space<vmem>>, vector<8x128xf32>,
    return
  }
  func.func @transform_0(%arg0: i32) -> (i32, i32) {
    %c0_i32 = arith.constant 0 : i32
    %c0_i32_0 = arith.constant 0 : i32
    return %arg0, %c0_i32 : i32, i32
  }
  func.func @transform_1(%arg0: i32) -> (i32, i32) {
    %c0_i32 = arith.constant 0 : i32
    %c0_i32_0 = arith.constant 0 : i32
    %c0_i32_1 = arith.constant 0 : i32
    return %c0_i32, %c0_i32_0 : i32, i32
  }
  func.func @transform_2(%arg0: i32) -> (i32, i32) {
    %c0_i32 = arith.constant 0 : i32
    %c0_i32_0 = arith.constant 0 : i32
    %c0_i32_1 = arith.constant 0 : i32
    return %c0_i32, %c0_i32_0 : i32, i32
  }
  func.func @transform_3(%arg0: i32) -> (i32, i32) {
    %c0_i32 = arith.constant 0 : i32
    %c0_i32_0 = arith.constant 0 : i32
    return %arg0, %c0_i32 : i32, i32
  }
}

</mosaic_0001>

<llo_original>
// kernel: tpu_custom_call.1
$region0: #{tpu_custom_call.1}
  #allocation0 [shape = 'u32[]', space=smem, size = 0x4, offset = 0x4, fixed_abs, tag = 'smem constant byte address 0x4 - core index']
  #allocation1 [shape = 'u32[144,128]{1,0:T(1,128)}', space=vmem, size = 0x12000, scoped, tag = 'internal scratch']
  %s0 = inlined_call_operand.hbm [shape: f32[2,1024], index: 0, kind: input, shape index: {}]
  %s1 = inlined_call_operand.hbm [shape: bf16[1024,128], index: 1, kind: input, shape index: {}]
  %s2 = inlined_call_operand.vmem [shape: f32[1,128], index: 2, kind: input, shape index: {}]
  %s3 = inlined_call_operand.hbm [shape: f32[2,128], index: 3, kind: output, shape index: {}]
  %s4 = sld [smem:[#allocation0]]
  $region30: #{tpu_custom_call.1} parent=0
    _
  %s6 = ssub.s32 1, %s4
  %s7 = scalar_select 0, %s6, %s4
  $region1: #{tpu_custom_call.1} parent=0
    #allocation2 [shape = 'u8[32768]{0}', space=vmem, size = 0x8000, scoped, tag = 'input window, operand 0, single buffered']
    #allocation3 [shape = 's32[1]{0}', space=sflag, size = 0x4, scoped, tag = 'scoped memory for tpu_custom_call.1']
    #allocation4 [shape = 's32[1]{0}', space=sflag, size = 0x4, scoped, tag = 'scoped memory for tpu_custom_call.1']
    #allocation5 [shape = 'u8[262144]{0}', space=vmem, size = 0x40000, scoped, tag = 'input window, operand 1, single buffered']
    #allocation6 [shape = 's32[1]{0}', space=sflag, size = 0x4, scoped, tag = 'scoped memory for tpu_custom_call.1']
    #allocation7 [shape = 'u8[4096]{0}', space=vmem, size = 0x1000, scoped, tag = 'output window, operand 0, single buffered']
    %8 = vsyncpa [#allocation3], 0
    %9 = vsyncpa [#allocation6], 0
    %10 = vsyncpa [#allocation4], 0
    // Predicated region
    $region2: #{tpu_custom_call.1} parent=1 // pred_check
      _
    $region3: #{tpu_custom_call.1} parent=1 // pred_check_branch
      %12 = sbr.rel (0) target = $region5
    $region4: #{tpu_custom_call.1} parent=1 // pred_region
      %s14 = ssub.s32 1024, 256
      %15 = vsyncadd [#allocation3], %s14
      %s16 = sshll.u32 [#allocation2], 4
      %s17 = int_to_ptr.vmem [resolvable:$true] %s16
      %22 = dma.hbm_to_vmem [thread:$0]  %s0, 256, %s17, [#allocation3], 256, 256, 16
    $region5: #{tpu_custom_call.1} parent=1 // pred_fallthru
      _
    // Predicated region
    $region6: #{tpu_custom_call.1} parent=1 // pred_check
      _
    $region7: #{tpu_custom_call.1} parent=1 // pred_check_branch
      %24 = sbr.rel (0) target = $region9
    $region8: #{tpu_custom_call.1} parent=1 // pred_region
      %s26 = ssub.s32 8192, 8192
      %27 = vsyncadd [#allocation6], %s26
      %s28 = sshll.u32 [#allocation5], 4
      %s29 = int_to_ptr.vmem [resolvable:$true] %s28
      %34 = dma.hbm_to_vmem [thread:$0]  %s1, 8192, %s29, [#allocation6], 64, 64, 4
    $region9: #{tpu_custom_call.1} parent=1 // pred_fallthru
      _
    // Predicated region
    $region10: #{tpu_custom_call.1} parent=1 // pred_check
      _
    $region11: #{tpu_custom_call.1} parent=1 // pred_check_branch
      %36 = sbr.rel (0) target = $region13
    $region12: #{tpu_custom_call.1} parent=1 // pred_region
      _
    $region13: #{tpu_custom_call.1} parent=1 // pred_fallthru
      _
    // Predicated region
    $region14: #{tpu_custom_call.1} parent=1 // pred_check
      _
    $region15: #{tpu_custom_call.1} parent=1 // pred_check_branch
      %38 = sbr.rel (0) target = $region17
    $region16: #{tpu_custom_call.1} parent=1 // pred_region
      %39 = dma.done [#allocation3], 1024
    $region17: #{tpu_custom_call.1} parent=1 // pred_fallthru
      _
    // Predicated region
    $region18: #{tpu_custom_call.1} parent=1 // pred_check
      _
    $region19: #{tpu_custom_call.1} parent=1 // pred_check_branch
      %41 = sbr.rel (0) target = $region21
    $region20: #{tpu_custom_call.1} parent=1 // pred_region
      %42 = dma.done [#allocation6], 8192
    $region21: #{tpu_custom_call.1} parent=1 // pred_fallthru
      _
    %v44 = vld [vmem:[#allocation2] sm:$0xff]
    %v45 = vld [vmem:[#allocation2 + $0x8] sm:$0xff]
    %v46 = vld [vmem:[#allocation2 + $0x10] sm:$0xff]
    %v47 = vld [vmem:[#allocation2 + $0x18] sm:$0xff]
    %v48 = vld [vmem:[#allocation2 + $0x20] sm:$0xff]
    %v49 = vld [vmem:[#allocation2 + $0x28] sm:$0xff]
    %v50 = vld [vmem:[#allocation2 + $0x30] sm:$0xff]
    %v51 = vld [vmem:[#allocation2 + $0x38] sm:$0xff]
    %v60 = vcombine.low %v44, %v46
    %v61 = vcombine.high %v44, %v46
    %v62 = vcombine.low %v48, %v50
    %v63 = vcombine.high %v48, %v50
    %v65 = vunpack.c.l.s4 1983009808
    %v66 = vunpack.c.0.s8 %v65
    %v67 = vlaneseq
    %v68 = vshrl.u32 %v67, 7
    %v69 = vsub.s32 %v66, %v68
    %v70 = vrot.slane %v60, %v69
    %v72 = vunpack.c.l.s4 1983009808
    %v73 = vunpack.c.0.s8 %v72
    %v74 = vlaneseq
    %v75 = vshrl.u32 %v74, 7
    %v76 = vsub.s32 %v73, %v75
    %v77 = vrot.slane %v61, %v76
    %v79 = vunpack.c.l.s4 1983009808
    %v80 = vunpack.c.0.s8 %v79
    %v81 = vlaneseq
    %v82 = vshrl.u32 %v81, 7
    %v83 = vsub.s32 %v80, %v82
    %v84 = vrot.slane %v62, %v83
    %v86 = vunpack.c.l.s4 1983009808
    %v87 = vunpack.c.0.s8 %v86
    %v88 = vlaneseq
    %v89 = vshrl.u32 %v88, 7
    %v90 = vsub.s32 %v87, %v89
    %v91 = vrot.slane %v63, %v90
    %v92 = vcombine.low %v70, %v84
    %v93 = vcombine.high %v70, %v84
    %v94 = vcombine.low %v77, %v91
    %v95 = vcombine.high %v77, %v91
    %v96 = vcombine.low %v45, %v47
    %v97 = vcombine.high %v45, %v47
    %v98 = vcombine.low %v49, %v51
    %v99 = vcombine.high %v49, %v51
    %v101 = vunpack.c.l.s4 1983009808
    %v102 = vunpack.c.0.s8 %v101
    %v103 = vlaneseq
    %v104 = vshrl.u32 %v103, 7
    %v105 = vsub.s32 %v102, %v104
    %v106 = vrot.slane %v96, %v105
    %v108 = vunpack.c.l.s4 1983009808
    %v109 = vunpack.c.0.s8 %v108
    %v110 = vlaneseq
    %v111 = vshrl.u32 %v110, 7
    %v112 = vsub.s32 %v109, %v111
    %v113 = vrot.slane %v97, %v112
    %v115 = vunpack.c.l.s4 1983009808
    %v116 = vunpack.c.0.s8 %v115
    %v117 = vlaneseq
    %v118 = vshrl.u32 %v117, 7
    %v119 = vsub.s32 %v116, %v118
    %v120 = vrot.slane %v98, %v119
    %v122 = vunpack.c.l.s4 1983009808
    %v123 = vunpack.c.0.s8 %v122
    %v124 = vlaneseq
    %v125 = vshrl.u32 %v124, 7
    %v126 = vsub.s32 %v123, %v125
    %v127 = vrot.slane %v99, %v126
    %v128 = vcombine.low %v106, %v120
    %v129 = vcombine.high %v106, %v120
    %v130 = vcombine.low %v113, %v127
    %v131 = vcombine.high %v113, %v127
    %v140 = vpack.c.bf16 %v92, %v92
    %v141 = vpack.c.bf16 %v93, %v93
    %v142 = vpack.c.bf16 %v94, %v94
    %v143 = vpack.c.bf16 %v95, %v95
    %v144 = vpack.c.bf16 %v128, %v128
    %v145 = vpack.c.bf16 %v129, %v129
    %v146 = vpack.c.bf16 %v130, %v130
    %v147 = vpack.c.bf16 %v131, %v131
    %v148 = vld [vmem:[#allocation5] sm:$0xf]
    %v149 = vld [vmem:[#allocation5 + $0x4] sm:$0xf]
    %v150 = vld [vmem:[#allocation5 + $0x8] sm:$0xf]
    %v151 = vld [vmem:[#allocation5 + $0xc] sm:$0xf]
    %v152 = vld [vmem:[#allocation5 + $0x10] sm:$0xf]
    %v153 = vld [vmem:[#allocation5 + $0x14] sm:$0xf]
    %v154 = vld [vmem:[#allocation5 + $0x18] sm:$0xf]
    %v155 = vld [vmem:[#allocation5 + $0x1c] sm:$0xf]
    %v156 = vld [vmem:[#allocation5 + $0x20] sm:$0xf]
    %v157 = vld [vmem:[#allocation5 + $0x24] sm:$0xf]
    %v158 = vld [vmem:[#allocation5 + $0x28] sm:$0xf]
    %v159 = vld [vmem:[#allocation5 + $0x2c] sm:$0xf]
    %v160 = vld [vmem:[#allocation5 + $0x30] sm:$0xf]
    %v161 = vld [vmem:[#allocation5 + $0x34] sm:$0xf]
    %v162 = vld [vmem:[#allocation5 + $0x38] sm:$0xf]
    %v163 = vld [vmem:[#allocation5 + $0x3c] sm:$0xf]
    %v164 = vld [vmem:[#allocation5 + $0x40] sm:$0xf]
    %v165 = vld [vmem:[#allocation5 + $0x44] sm:$0xf]
    %v166 = vld [vmem:[#allocation5 + $0x48] sm:$0xf]
    %v167 = vld [vmem:[#allocation5 + $0x4c] sm:$0xf]
    %v168 = vld [vmem:[#allocation5 + $0x50] sm:$0xf]
    %v169 = vld [vmem:[#allocation5 + $0x54] sm:$0xf]
    %v170 = vld [vmem:[#allocation5 + $0x58] sm:$0xf]
    %v171 = vld [vmem:[#allocation5 + $0x5c] sm:$0xf]
    %v172 = vld [vmem:[#allocation5 + $0x60] sm:$0xf]
    %v173 = vld [vmem:[#allocation5 + $0x64] sm:$0xf]
    %v174 = vld [vmem:[#allocation5 + $0x68] sm:$0xf]
    %v175 = vld [vmem:[#allocation5 + $0x6c] sm:$0xf]
    %v176 = vld [vmem:[#allocation5 + $0x70] sm:$0xf]
    %v177 = vld [vmem:[#allocation5 + $0x74] sm:$0xf]
    %v178 = vld [vmem:[#allocation5 + $0x78] sm:$0xf]
    %v179 = vld [vmem:[#allocation5 + $0x7c] sm:$0xf]
    %v180 = vld [vmem:[#allocation5 + $0x80] sm:$0xf]
    %v181 = vld [vmem:[#allocation5 + $0x84] sm:$0xf]
    %v182 = vld [vmem:[#allocation5 + $0x88] sm:$0xf]
    %v183 = vld [vmem:[#allocation5 + $0x8c] sm:$0xf]
    %v184 = vld [vmem:[#allocation5 + $0x90] sm:$0xf]
    %v185 = vld [vmem:[#allocation5 + $0x94] sm:$0xf]
    %v186 = vld [vmem:[#allocation5 + $0x98] sm:$0xf]
    %v187 = vld [vmem:[#allocation5 + $0x9c] sm:$0xf]
    %v188 = vld [vmem:[#allocation5 + $0xa0] sm:$0xf]
    %v189 = vld [vmem:[#allocation5 + $0xa4] sm:$0xf]
    %v190 = vld [vmem:[#allocation5 + $0xa8] sm:$0xf]
    %v191 = vld [vmem:[#allocation5 + $0xac] sm:$0xf]
    %v192 = vld [vmem:[#allocation5 + $0xb0] sm:$0xf]
    %v193 = vld [vmem:[#allocation5 + $0xb4] sm:$0xf]
    %v194 = vld [vmem:[#allocation5 + $0xb8] sm:$0xf]
    %v195 = vld [vmem:[#allocation5 + $0xbc] sm:$0xf]
    %v196 = vld [vmem:[#allocation5 + $0xc0] sm:$0xf]
    %v197 = vld [vmem:[#allocation5 + $0xc4] sm:$0xf]
    %v198 = vld [vmem:[#allocation5 + $0xc8] sm:$0xf]
    %v199 = vld [vmem:[#allocation5 + $0xcc] sm:$0xf]
    %v200 = vld [vmem:[#allocation5 + $0xd0] sm:$0xf]
    %v201 = vld [vmem:[#allocation5 + $0xd4] sm:$0xf]
    %v202 = vld [vmem:[#allocation5 + $0xd8] sm:$0xf]
    %v203 = vld [vmem:[#allocation5 + $0xdc] sm:$0xf]
    %v204 = vld [vmem:[#allocation5 + $0xe0] sm:$0xf]
    %v205 = vld [vmem:[#allocation5 + $0xe4] sm:$0xf]
    %v206 = vld [vmem:[#allocation5 + $0xe8] sm:$0xf]
    %v207 = vld [vmem:[#allocation5 + $0xec] sm:$0xf]
    %v208 = vld [vmem:[#allocation5 + $0xf0] sm:$0xf]
    %v209 = vld [vmem:[#allocation5 + $0xf4] sm:$0xf]
    %v210 = vld [vmem:[#allocation5 + $0xf8] sm:$0xf]
    %v211 = vld [vmem:[#allocation5 + $0xfc] sm:$0xf]
    %v212 = vld [vmem:[#allocation5 + $0x100] sm:$0xf]
    %v213 = vld [vmem:[#allocation5 + $0x104] sm:$0xf]
    %v214 = vld [vmem:[#allocation5 + $0x108] sm:$0xf]
    %v215 = vld [vmem:[#allocation5 + $0x10c] sm:$0xf]
    %v216 = vld [vmem:[#allocation5 + $0x110] sm:$0xf]
    %v217 = vld [vmem:[#allocation5 + $0x114] sm:$0xf]
    %v218 = vld [vmem:[#allocation5 + $0x118] sm:$0xf]
    %v219 = vld [vmem:[#allocation5 + $0x11c] sm:$0xf]
    %v220 = vld [vmem:[#allocation5 + $0x120] sm:$0xf]
    %v221 = vld [vmem:[#allocation5 + $0x124] sm:$0xf]
    %v222 = vld [vmem:[#allocation5 + $0x128] sm:$0xf]
    %v223 = vld [vmem:[#allocation5 + $0x12c] sm:$0xf]
    %v224 = vld [vmem:[#allocation5 + $0x130] sm:$0xf]
    %v225 = vld [vmem:[#allocation5 + $0x134] sm:$0xf]
    %v226 = vld [vmem:[#allocation5 + $0x138] sm:$0xf]
    %v227 = vld [vmem:[#allocation5 + $0x13c] sm:$0xf]
    %v228 = vld [vmem:[#allocation5 + $0x140] sm:$0xf]
    %v229 = vld [vmem:[#allocation5 + $0x144] sm:$0xf]
    %v230 = vld [vmem:[#allocation5 + $0x148] sm:$0xf]
    %v231 = vld [vmem:[#allocation5 + $0x14c] sm:$0xf]
    %v232 = vld [vmem:[#allocation5 + $0x150] sm:$0xf]
    %v233 = vld [vmem:[#allocation5 + $0x154] sm:$0xf]
    %v234 = vld [vmem:[#allocation5 + $0x158] sm:$0xf]
    %v235 = vld [vmem:[#allocation5 + $0x15c] sm:$0xf]
    %v236 = vld [vmem:[#allocation5 + $0x160] sm:$0xf]
    %v237 = vld [vmem:[#allocation5 + $0x164] sm:$0xf]
    %v238 = vld [vmem:[#allocation5 + $0x168] sm:$0xf]
    %v239 = vld [vmem:[#allocation5 + $0x16c] sm:$0xf]
    %v240 = vld [vmem:[#allocation5 + $0x170] sm:$0xf]
    %v241 = vld [vmem:[#allocation5 + $0x174] sm:$0xf]
    %v242 = vld [vmem:[#allocation5 + $0x178] sm:$0xf]
    %v243 = vld [vmem:[#allocation5 + $0x17c] sm:$0xf]
    %v244 = vld [vmem:[#allocation5 + $0x180] sm:$0xf]
    %v245 = vld [vmem:[#allocation5 + $0x184] sm:$0xf]
    %v246 = vld [vmem:[#allocation5 + $0x188] sm:$0xf]
    %v247 = vld [vmem:[#allocation5 + $0x18c] sm:$0xf]
    %v248 = vld [vmem:[#allocation5 + $0x190] sm:$0xf]
    %v249 = vld [vmem:[#allocation5 + $0x194] sm:$0xf]
    %v250 = vld [vmem:[#allocation5 + $0x198] sm:$0xf]
    %v251 = vld [vmem:[#allocation5 + $0x19c] sm:$0xf]
    %v252 = vld [vmem:[#allocation5 + $0x1a0] sm:$0xf]
    %v253 = vld [vmem:[#allocation5 + $0x1a4] sm:$0xf]
    %v254 = vld [vmem:[#allocation5 + $0x1a8] sm:$0xf]
    %v255 = vld [vmem:[#allocation5 + $0x1ac] sm:$0xf]
    %v256 = vld [vmem:[#allocation5 + $0x1b0] sm:$0xf]
    %v257 = vld [vmem:[#allocation5 + $0x1b4] sm:$0xf]
    %v258 = vld [vmem:[#allocation5 + $0x1b8] sm:$0xf]
    %v259 = vld [vmem:[#allocation5 + $0x1bc] sm:$0xf]
    %v260 = vld [vmem:[#allocation5 + $0x1c0] sm:$0xf]
    %v261 = vld [vmem:[#allocation5 + $0x1c4] sm:$0xf]
    %v262 = vld [vmem:[#allocation5 + $0x1c8] sm:$0xf]
    %v263 = vld [vmem:[#allocation5 + $0x1cc] sm:$0xf]
    %v264 = vld [vmem:[#allocation5 + $0x1d0] sm:$0xf]
    %v265 = vld [vmem:[#allocation5 + $0x1d4] sm:$0xf]
    %v266 = vld [vmem:[#allocation5 + $0x1d8] sm:$0xf]
    %v267 = vld [vmem:[#allocation5 + $0x1dc] sm:$0xf]
    %v268 = vld [vmem:[#allocation5 + $0x1e0] sm:$0xf]
    %v269 = vld [vmem:[#allocation5 + $0x1e4] sm:$0xf]
    %v270 = vld [vmem:[#allocation5 + $0x1e8] sm:$0xf]
    %v271 = vld [vmem:[#allocation5 + $0x1ec] sm:$0xf]
    %v272 = vld [vmem:[#allocation5 + $0x1f0] sm:$0xf]
    %v273 = vld [vmem:[#allocation5 + $0x1f4] sm:$0xf]
    %v274 = vld [vmem:[#allocation5 + $0x1f8] sm:$0xf]
    %v275 = vld [vmem:[#allocation5 + $0x1fc] sm:$0xf]
    %v276 = vld [vmem:[%s2] sm:$0x1]
    %v278 = vlaneseq
    %v279 = vshrl.u32 %v278, 7
    %v280 = vsub.s32 0, %v279
    %v281 = vrot.slane %v276, %v280
    %v411 = vunpack.c.l.b16 %v148
    %v412 = vunpack.c.l.b16 %v149
    %v413 = vunpack.c.l.b16 %v150
    %v414 = vunpack.c.l.b16 %v151
    %v415 = vunpack.c.l.b16 %v152
    %v416 = vunpack.c.l.b16 %v153
    %v417 = vunpack.c.l.b16 %v154
    %v418 = vunpack.c.l.b16 %v155
    %v419 = vunpack.c.l.b16 %v156
    %v420 = vunpack.c.l.b16 %v157
    %v421 = vunpack.c.l.b16 %v158
    %v422 = vunpack.c.l.b16 %v159
    %v423 = vunpack.c.l.b16 %v160
    %v424 = vunpack.c.l.b16 %v161
    %v425 = vunpack.c.l.b16 %v162
    %v426 = vunpack.c.l.b16 %v163
    %v427 = vunpack.c.l.b16 %v164
    %v428 = vunpack.c.l.b16 %v165
    %v429 = vunpack.c.l.b16 %v166
    %v430 = vunpack.c.l.b16 %v167
    %v431 = vunpack.c.l.b16 %v168
    %v432 = vunpack.c.l.b16 %v169
    %v433 = vunpack.c.l.b16 %v170
    %v434 = vunpack.c.l.b16 %v171
    %v435 = vunpack.c.l.b16 %v172
    %v436 = vunpack.c.l.b16 %v173
    %v437 = vunpack.c.l.b16 %v174
    %v438 = vunpack.c.l.b16 %v175
    %v439 = vunpack.c.l.b16 %v176
    %v440 = vunpack.c.l.b16 %v177
    %v441 = vunpack.c.l.b16 %v178
    %v442 = vunpack.c.l.b16 %v179
    %v443 = vunpack.c.l.b16 %v180
    %v444 = vunpack.c.l.b16 %v181
    %v445 = vunpack.c.l.b16 %v182
    %v446 = vunpack.c.l.b16 %v183
    %v447 = vunpack.c.l.b16 %v184
    %v448 = vunpack.c.l.b16 %v185
    %v449 = vunpack.c.l.b16 %v186
    %v450 = vunpack.c.l.b16 %v187
    %v451 = vunpack.c.l.b16 %v188
    %v452 = vunpack.c.l.b16 %v189
    %v453 = vunpack.c.l.b16 %v190
    %v454 = vunpack.c.l.b16 %v191
    %v455 = vunpack.c.l.b16 %v192
    %v456 = vunpack.c.l.b16 %v193
    %v457 = vunpack.c.l.b16 %v194
    %v458 = vunpack.c.l.b16 %v195
    %v459 = vunpack.c.l.b16 %v196
    %v460 = vunpack.c.l.b16 %v197
    %v461 = vunpack.c.l.b16 %v198
    %v462 = vunpack.c.l.b16 %v199
    %v463 = vunpack.c.l.b16 %v200
    %v464 = vunpack.c.l.b16 %v201
    %v465 = vunpack.c.l.b16 %v202
    %v466 = vunpack.c.l.b16 %v203
    %v467 = vunpack.c.l.b16 %v204
    %v468 = vunpack.c.l.b16 %v205
    %v469 = vunpack.c.l.b16 %v206
    %v470 = vunpack.c.l.b16 %v207
    %v471 = vunpack.c.l.b16 %v208
    %v472 = vunpack.c.l.b16 %v209
    %v473 = vunpack.c.l.b16 %v210
    %v474 = vunpack.c.l.b16 %v211
    %v475 = vunpack.c.l.b16 %v212
    %v476 = vunpack.c.l.b16 %v213
    %v477 = vunpack.c.l.b16 %v214
    %v478 = vunpack.c.l.b16 %v215
    %v479 = vunpack.c.l.b16 %v216
    %v480 = vunpack.c.l.b16 %v217
    %v481 = vunpack.c.l.b16 %v218
    %v482 = vunpack.c.l.b16 %v219
    %v483 = vunpack.c.l.b16 %v220
    %v484 = vunpack.c.l.b16 %v221
    %v485 = vunpack.c.l.b16 %v222
    %v486 = vunpack.c.l.b16 %v223
    %v487 = vunpack.c.l.b16 %v224
    %v488 = vunpack.c.l.b16 %v225
    %v489 = vunpack.c.l.b16 %v226
    %v490 = vunpack.c.l.b16 %v227
    %v491 = vunpack.c.l.b16 %v228
    %v492 = vunpack.c.l.b16 %v229
    %v493 = vunpack.c.l.b16 %v230
    %v494 = vunpack.c.l.b16 %v231
    %v495 = vunpack.c.l.b16 %v232
    %v496 = vunpack.c.l.b16 %v233
    %v497 = vunpack.c.l.b16 %v234
    %v498 = vunpack.c.l.b16 %v235
    %v499 = vunpack.c.l.b16 %v236
    %v500 = vunpack.c.l.b16 %v237
    %v501 = vunpack.c.l.b16 %v238
    %v502 = vunpack.c.l.b16 %v239
    %v503 = vunpack.c.l.b16 %v240
    %v504 = vunpack.c.l.b16 %v241
    %v505 = vunpack.c.l.b16 %v242
    %v506 = vunpack.c.l.b16 %v243
    %v507 = vunpack.c.l.b16 %v244
    %v508 = vunpack.c.l.b16 %v245
    %v509 = vunpack.c.l.b16 %v246
    %v510 = vunpack.c.l.b16 %v247
    %v511 = vunpack.c.l.b16 %v248
    %v512 = vunpack.c.l.b16 %v249
    %v513 = vunpack.c.l.b16 %v250
    %v514 = vunpack.c.l.b16 %v251
    %v515 = vunpack.c.l.b16 %v252
    %v516 = vunpack.c.l.b16 %v253
    %v517 = vunpack.c.l.b16 %v254
    %v518 = vunpack.c.l.b16 %v255
    %v519 = vunpack.c.l.b16 %v256
    %v520 = vunpack.c.l.b16 %v257
    %v521 = vunpack.c.l.b16 %v258
    %v522 = vunpack.c.l.b16 %v259
    %v523 = vunpack.c.l.b16 %v260
    %v524 = vunpack.c.l.b16 %v261
    %v525 = vunpack.c.l.b16 %v262
    %v526 = vunpack.c.l.b16 %v263
    %v527 = vunpack.c.l.b16 %v264
    %v528 = vunpack.c.l.b16 %v265
    %v529 = vunpack.c.l.b16 %v266
    %v530 = vunpack.c.l.b16 %v267
    %v531 = vunpack.c.l.b16 %v268
    %v532 = vunpack.c.l.b16 %v269
    %v533 = vunpack.c.l.b16 %v270
    %v534 = vunpack.c.l.b16 %v271
    %v535 = vunpack.c.l.b16 %v272
    %v536 = vunpack.c.l.b16 %v273
    %v537 = vunpack.c.l.b16 %v274
    %v538 = vunpack.c.l.b16 %v275
    %v539 = vpack.c.b16 %v412, %v411
    %v540 = vpack.c.b16 %v414, %v413
    %v541 = vpack.c.b16 %v416, %v415
    %v542 = vpack.c.b16 %v418, %v417
    %v543 = vpack.c.b16 %v420, %v419
    %v544 = vpack.c.b16 %v422, %v421
    %v545 = vpack.c.b16 %v424, %v423
    %v546 = vpack.c.b16 %v426, %v425
    %v547 = vpack.c.b16 %v428, %v427
    %v548 = vpack.c.b16 %v430, %v429
    %v549 = vpack.c.b16 %v432, %v431
    %v550 = vpack.c.b16 %v434, %v433
    %v551 = vpack.c.b16 %v436, %v435
    %v552 = vpack.c.b16 %v438, %v437
    %v553 = vpack.c.b16 %v440, %v439
    %v554 = vpack.c.b16 %v442, %v441
    %v555 = vpack.c.b16 %v444, %v443
    %v556 = vpack.c.b16 %v446, %v445
    %v557 = vpack.c.b16 %v448, %v447
    %v558 = vpack.c.b16 %v450, %v449
    %v559 = vpack.c.b16 %v452, %v451
    %v560 = vpack.c.b16 %v454, %v453
    %v561 = vpack.c.b16 %v456, %v455
    %v562 = vpack.c.b16 %v458, %v457
    %v563 = vpack.c.b16 %v460, %v459
    %v564 = vpack.c.b16 %v462, %v461
    %v565 = vpack.c.b16 %v464, %v463
    %v566 = vpack.c.b16 %v466, %v465
    %v567 = vpack.c.b16 %v468, %v467
    %v568 = vpack.c.b16 %v470, %v469
    %v569 = vpack.c.b16 %v472, %v471
    %v570 = vpack.c.b16 %v474, %v473
    %v571 = vpack.c.b16 %v476, %v475
    %v572 = vpack.c.b16 %v478, %v477
    %v573 = vpack.c.b16 %v480, %v479
    %v574 = vpack.c.b16 %v482, %v481
    %v575 = vpack.c.b16 %v484, %v483
    %v576 = vpack.c.b16 %v486, %v485
    %v577 = vpack.c.b16 %v488, %v487
    %v578 = vpack.c.b16 %v490, %v489
    %v579 = vpack.c.b16 %v492, %v491
    %v580 = vpack.c.b16 %v494, %v493
    %v581 = vpack.c.b16 %v496, %v495
    %v582 = vpack.c.b16 %v498, %v497
    %v583 = vpack.c.b16 %v500, %v499
    %v584 = vpack.c.b16 %v502, %v501
    %v585 = vpack.c.b16 %v504, %v503
    %v586 = vpack.c.b16 %v506, %v505
    %v587 = vpack.c.b16 %v508, %v507
    %v588 = vpack.c.b16 %v510, %v509
    %v589 = vpack.c.b16 %v512, %v511
    %v590 = vpack.c.b16 %v514, %v513
    %v591 = vpack.c.b16 %v516, %v515
    %v592 = vpack.c.b16 %v518, %v517
    %v593 = vpack.c.b16 %v520, %v519
    %v594 = vpack.c.b16 %v522, %v521
    %v595 = vpack.c.b16 %v524, %v523
    %v596 = vpack.c.b16 %v526, %v525
    %v597 = vpack.c.b16 %v528, %v527
    %v598 = vpack.c.b16 %v530, %v529
    %v599 = vpack.c.b16 %v532, %v531
    %v600 = vpack.c.b16 %v534, %v533
    %v601 = vpack.c.b16 %v536, %v535
    %v602 = vpack.c.b16 %v538, %v537
    %667 = vmatprep.subr.bf16.mxu0 0
    %668 = vmatpush1.bf16.msra.mxu0 %v539
    %669 = vmatprep.subr.bf16.mxu0 0
    %670 = vmatpush1.bf16.msra.mxu0 %v540
    %671 = vmatprep.subr.bf16.mxu0 0
    %672 = vmatpush1.bf16.msra.mxu0 %v541
    %673 = vmatprep.subr.bf16.mxu0 0
    %674 = vmatpush1.bf16.msra.mxu0 %v542
    %675 = vmatprep.subr.bf16.mxu0 0
    %676 = vmatpush1.bf16.msra.mxu0 %v543
    %677 = vmatprep.subr.bf16.mxu0 0
    %678 = vmatpush1.bf16.msra.mxu0 %v544
    %679 = vmatprep.subr.bf16.mxu0 0
    %680 = vmatpush1.bf16.msra.mxu0 %v545
    %681 = vmatprep.subr.bf16.mxu0 0
    %682 = vmatpush1.bf16.msra.mxu0 %v546
    %683 = vmatprep.subr.bf16.mxu0 0
    %684 = vmatpush1.bf16.msra.mxu0 %v547
    %685 = vmatprep.subr.bf16.mxu0 0
    %686 = vmatpush1.bf16.msra.mxu0 %v548
    %687 = vmatprep.subr.bf16.mxu0 0
    %688 = vmatpush1.bf16.msra.mxu0 %v549
    %689 = vmatprep.subr.bf16.mxu0 0
    %690 = vmatpush1.bf16.msra.mxu0 %v550
    %691 = vmatprep.subr.bf16.mxu0 0
    %692 = vmatpush1.bf16.msra.mxu0 %v551
    %693 = vmatprep.subr.bf16.mxu0 0
    %694 = vmatpush1.bf16.msra.mxu0 %v552
    %695 = vmatprep.subr.bf16.mxu0 0
    %696 = vmatpush1.bf16.msra.mxu0 %v553
    %697 = vmatprep.subr.bf16.mxu0 0
    %698 = vmatpush1.bf16.msra.mxu0 %v554
    %699 = vmatprep.mubr.bf16.mxu0 %v141
    %700 = vmatmul.mubr.bf16.gmra.mrb[0].mxu0 %v140
    %v701 = vpop.f32.mrb[0].mxu0
    %v702 = vadd.f32 %v281, %v701
    %v703 = vpop.f32.mrb[0].mxu0
    %v704 = vpop.f32.mrb[0].mxu0
    %v705 = vpop.f32.mrb[0].mxu0
    %706 = vdwg.mxu0
    %707 = vmatprep.subr.bf16.mxu0 0
    %708 = vmatpush1.bf16.msra.mxu0 %v555
    %709 = vmatprep.subr.bf16.mxu0 0
    %710 = vmatpush1.bf16.msra.mxu0 %v556
    %711 = vmatprep.subr.bf16.mxu0 0
    %712 = vmatpush1.bf16.msra.mxu0 %v557
    %713 = vmatprep.subr.bf16.mxu0 0
    %714 = vmatpush1.bf16.msra.mxu0 %v558
    %715 = vmatprep.subr.bf16.mxu0 0
    %716 = vmatpush1.bf16.msra.mxu0 %v559
    %717 = vmatprep.subr.bf16.mxu0 0
    %718 = vmatpush1.bf16.msra.mxu0 %v560
    %719 = vmatprep.subr.bf16.mxu0 0
    %720 = vmatpush1.bf16.msra.mxu0 %v561
    %721 = vmatprep.subr.bf16.mxu0 0
    %722 = vmatpush1.bf16.msra.mxu0 %v562
    %723 = vmatprep.subr.bf16.mxu0 0
    %724 = vmatpush1.bf16.msra.mxu0 %v563
    %725 = vmatprep.subr.bf16.mxu0 0
    %726 = vmatpush1.bf16.msra.mxu0 %v564
    %727 = vmatprep.subr.bf16.mxu0 0
    %728 = vmatpush1.bf16.msra.mxu0 %v565
    %729 = vmatprep.subr.bf16.mxu0 0
    %730 = vmatpush1.bf16.msra.mxu0 %v566
    %731 = vmatprep.subr.bf16.mxu0 0
    %732 = vmatpush1.bf16.msra.mxu0 %v567
    %733 = vmatprep.subr.bf16.mxu0 0
    %734 = vmatpush1.bf16.msra.mxu0 %v568
    %735 = vmatprep.subr.bf16.mxu0 0
    %736 = vmatpush1.bf16.msra.mxu0 %v569
    %737 = vmatprep.subr.bf16.mxu0 0
    %738 = vmatpush1.bf16.msra.mxu0 %v570
    %739 = vmatprep.mubr.bf16.mxu0 %v143
    %740 = vmatmul.mubr.bf16.gmra.mrb[0].mxu0 %v142
    %v741 = vpop.f32.mrb[0].mxu0
    %v742 = vadd.f32 %v702, %v741
    %v743 = vpop.f32.mrb[0].mxu0
    %v744 = vpop.f32.mrb[0].mxu0
    %v745 = vpop.f32.mrb[0].mxu0
    %746 = vdwg.mxu0
    %747 = vmatprep.subr.bf16.mxu0 0
    %748 = vmatpush1.bf16.msra.mxu0 %v571
    %749 = vmatprep.subr.bf16.mxu0 0
    %750 = vmatpush1.bf16.msra.mxu0 %v572
    %751 = vmatprep.subr.bf16.mxu0 0
    %752 = vmatpush1.bf16.msra.mxu0 %v573
    %753 = vmatprep.subr.bf16.mxu0 0
    %754 = vmatpush1.bf16.msra.mxu0 %v574
    %755 = vmatprep.subr.bf16.mxu0 0
    %756 = vmatpush1.bf16.msra.mxu0 %v575
    %757 = vmatprep.subr.bf16.mxu0 0
    %758 = vmatpush1.bf16.msra.mxu0 %v576
    %759 = vmatprep.subr.bf16.mxu0 0
    %760 = vmatpush1.bf16.msra.mxu0 %v577
    %761 = vmatprep.subr.bf16.mxu0 0
    %762 = vmatpush1.bf16.msra.mxu0 %v578
    %763 = vmatprep.subr.bf16.mxu0 0
    %764 = vmatpush1.bf16.msra.mxu0 %v579
    %765 = vmatprep.subr.bf16.mxu0 0
    %766 = vmatpush1.bf16.msra.mxu0 %v580
    %767 = vmatprep.subr.bf16.mxu0 0
    %768 = vmatpush1.bf16.msra.mxu0 %v581
    %769 = vmatprep.subr.bf16.mxu0 0
    %770 = vmatpush1.bf16.msra.mxu0 %v582
    %771 = vmatprep.subr.bf16.mxu0 0
    %772 = vmatpush1.bf16.msra.mxu0 %v583
    %773 = vmatprep.subr.bf16.mxu0 0
    %774 = vmatpush1.bf16.msra.mxu0 %v584
    %775 = vmatprep.subr.bf16.mxu0 0
    %776 = vmatpush1.bf16.msra.mxu0 %v585
    %777 = vmatprep.subr.bf16.mxu0 0
    %778 = vmatpush1.bf16.msra.mxu0 %v586
    %779 = vmatprep.mubr.bf16.mxu0 %v145
    %780 = vmatmul.mubr.bf16.gmra.mrb[0].mxu0 %v144
    %v781 = vpop.f32.mrb[0].mxu0
    %v782 = vadd.f32 %v742, %v781
    %v783 = vpop.f32.mrb[0].mxu0
    %v784 = vpop.f32.mrb[0].mxu0
    %v785 = vpop.f32.mrb[0].mxu0
    %786 = vdwg.mxu0
    %787 = vmatprep.subr.bf16.mxu0 0
    %788 = vmatpush1.bf16.msra.mxu0 %v587
    %789 = vmatprep.subr.bf16.mxu0 0
    %790 = vmatpush1.bf16.msra.mxu0 %v588
    %791 = vmatprep.subr.bf16.mxu0 0
    %792 = vmatpush1.bf16.msra.mxu0 %v589
    %793 = vmatprep.subr.bf16.mxu0 0
    %794 = vmatpush1.bf16.msra.mxu0 %v590
    %795 = vmatprep.subr.bf16.mxu0 0
    %796 = vmatpush1.bf16.msra.mxu0 %v591
    %797 = vmatprep.subr.bf16.mxu0 0
    %798 = vmatpush1.bf16.msra.mxu0 %v592
    %799 = vmatprep.subr.bf16.mxu0 0
    %800 = vmatpush1.bf16.msra.mxu0 %v593
    %801 = vmatprep.subr.bf16.mxu0 0
    %802 = vmatpush1.bf16.msra.mxu0 %v594
    %803 = vmatprep.subr.bf16.mxu0 0
    %804 = vmatpush1.bf16.msra.mxu0 %v595
    %805 = vmatprep.subr.bf16.mxu0 0
    %806 = vmatpush1.bf16.msra.mxu0 %v596
    %807 = vmatprep.subr.bf16.mxu0 0
    %808 = vmatpush1.bf16.msra.mxu0 %v597
    %809 = vmatprep.subr.bf16.mxu0 0
    %810 = vmatpush1.bf16.msra.mxu0 %v598
    %811 = vmatprep.subr.bf16.mxu0 0
    %812 = vmatpush1.bf16.msra.mxu0 %v599
    %813 = vmatprep.subr.bf16.mxu0 0
    %814 = vmatpush1.bf16.msra.mxu0 %v600
    %815 = vmatprep.subr.bf16.mxu0 0
    %816 = vmatpush1.bf16.msra.mxu0 %v601
    %817 = vmatprep.subr.bf16.mxu0 0
    %818 = vmatpush1.bf16.msra.mxu0 %v602
    %819 = vmatprep.mubr.bf16.mxu0 %v147
    %820 = vmatmul.mubr.bf16.gmra.mrb[0].mxu0 %v146
    %v821 = vpop.f32.mrb[0].mxu0
    %v822 = vadd.f32 %v782, %v821
    %v823 = vpop.f32.mrb[0].mxu0
    %v824 = vpop.f32.mrb[0].mxu0
    %v825 = vpop.f32.mrb[0].mxu0
    %826 = vdwg.mxu0
    %s827 = smul.u32 0, 8
    %v828 = vlaneseq
    %v829 = vshrl.u32 %v828, 7
    %v830 = vstv %s827
    %v831 = vadd.s32 %v830, %v829
    %vm832 = vcmp.lt.s32.totalorder %v831, 2
    %v833 = vsel %vm832, 1, 0
    %vm834 = vcmp.eq.s32.totalorder %v833, 1
    %v835 = vsel %vm834, %v822, 0.0
    %836 = vmax.xlane.f32.xlu0 %v835
    %v837 = vpop.xlane.xlu0 %836
    %v838 = vsub.f32 %v835, %v837
    %v839 = vmul.f32 %v838, 1.442695
    %v840 = vpow.pop %v839
    %841 = vadd.xlane.f32.xlu0 %v840
    %v842 = vpop.xlane.xlu0 %841
    %v843 = vrcp.pop %v842
    %v844 = vmul.f32 %v840, %v843
    %845 = vst [vmem:[#allocation7] sm:$0xff] %v844
    // Predicated region
    $region22: #{tpu_custom_call.1} parent=1 // pred_check
      _
    $region23: #{tpu_custom_call.1} parent=1 // pred_check_branch
      %847 = sbr.rel (0) target = $region25
    $region24: #{tpu_custom_call.1} parent=1 // pred_region
      %s849 = ssub.s32 128, 32
      %850 = vsyncadd [#allocation4], %s849
      %s851 = sshll.u32 [#allocation7], 4
      %s852 = int_to_ptr.vmem [resolvable:$true] %s851
      %857 = dma.vmem_to_hbm [thread:$0]  %s852, 32, %s3, [#allocation4], 32, 32, 2
    $region25: #{tpu_custom_call.1} parent=1 // pred_fallthru
      _
    // Predicated region
    $region26: #{tpu_custom_call.1} parent=1 // pred_check
      _
    $region27: #{tpu_custom_call.1} parent=1 // pred_check_branch
      %859 = sbr.rel (0) target = $region29
    $region28: #{tpu_custom_call.1} parent=1 // pred_region
      %860 = dma.done [#allocation4], 128
    $region29: #{tpu_custom_call.1} parent=1 // pred_fallthru
      _
    %861 = vsyncpa [#allocation3], 1
    %862 = vsyncpa [#allocation6], 1
    %863 = vsyncpa [#allocation4], 1

</llo_original>
